<compile_context>
chip_gen: v5e
topology: v5e:2x2
jax: 0.10.0
libtpu: 0.0.40
codegen_flags: <defaults>
</compile_context>

<pallas_src>
import math

import jax
import jax.numpy as jnp
from jax.experimental import pallas as pl
from jax.experimental.pallas import tpu as pltpu

_HALF_LOG_2PI = 0.5 * math.log(2.0 * math.pi)


def _ssq_kernel(xr_ref, xs_ref, acc_ref):
    """Accumulate per-lane partial sums of (x_s - x_s_recon)^2.

    xr_ref / xs_ref : VMEM (B, block_rows, 128) streamed chunks (any float dtype)
    acc_ref         : VMEM (1, B, 128) f32 per-lane partials, resident across k
    """
    k = pl.program_id(1)

    @pl.when(k == 0)
    def _init():
        # Output VMEM block is not zero-initialised; zero it once per partition.
        acc_ref[...] = jnp.zeros_like(acc_ref)

    diff = xs_ref[...].astype(jnp.float32) - xr_ref[...].astype(jnp.float32)
    # Reduce only the row (sublane) axis here: mostly VALU vreg adds. The final
    # 128-lane cross-lane reduce is deferred to the wrapper (one tiny op).
    acc_ref[...] += jnp.sum(diff * diff, axis=1)[None]


def _cdiv(a, b):
    return -(-a // b)


def _round_up(x, m):
    return ((x + m - 1) // m) * m


def _plan_blocks(B, TF, itemsize, block_rows=None, target_block_bytes=4 * 2**20):
    """Pick a byte-budgeted, sublane-aligned row-block size and the grid."""
    n_rows = _cdiv(TF, 128)                       # rows of 128 lanes per batch
    row_align = max(8, 32 // itemsize)            # f32: 8, bf16: 16, int8/fp8: 32
    if block_rows is None:
        rows_target = max(row_align, target_block_bytes // (B * 128 * itemsize))
        block_rows = (rows_target // row_align) * row_align
    block_rows = max(row_align, _round_up(block_rows, row_align))
    block_rows = min(block_rows, _round_up(n_rows, row_align))
    n_chunks = _cdiv(n_rows, block_rows)
    n_rows_pad = n_chunks * block_rows
    n_par = 2 if (n_chunks >= 2 and n_chunks % 2 == 0) else 1
    n_k = n_chunks // n_par
    return block_rows, n_rows_pad, n_par, n_k


def _pack_lane_dense(x, B, TF, n_rows_pad):
    """(B, T, F) -> zero-padded lane/sublane-dense (B, n_rows_pad, 128)."""
    x = x.reshape(B, TF)
    pad = n_rows_pad * 128 - TF
    if pad:
        x = jnp.pad(x, ((0, 0), (0, pad)))
    return x.reshape(B, n_rows_pad, 128)


def elbo_loss_vae(x_m, x_m_recon, x_s, x_s_recon,
                  timbre_latent, tau_mu, tau_std, log_scale,
                  pitch_latent=None, pitch_priors=None,
                  *, block_rows=None, target_block_bytes=4 * 2**20):
    # x_m / x_m_recon / pitch_* accepted for API parity but unused, exactly
    # like the PyTorch forward.
    del x_m, x_m_recon, pitch_latent, pitch_priors

    B, T, F = x_s.shape
    TF = T * F
    itemsize = jnp.dtype(x_s.dtype).itemsize

    block_rows, n_rows_pad, n_par, n_k = _plan_blocks(
        B, TF, itemsize, block_rows, target_block_bytes)

    # Lane/sublane-dense layout. Zero padding is exact for the streamed term
    # (both tensors pad with zeros, so diff == 0 there); the constant term
    # below uses the true, unpadded TF.
    xs = _pack_lane_dense(x_s, B, TF, n_rows_pad)
    xr = _pack_lane_dense(x_s_recon, B, TF, n_rows_pad)

    block_bytes = B * block_rows * 128 * itemsize
    # 2 streamed inputs x 2 pipeline buffers + headroom; keep under ~48 MiB so
    # it fits v7x's 64 MiB physical VMEM, but raise above the 16/32 MiB
    # default scoped limits so multi-MiB blocks are accepted on v5e/v6e.
    vmem_limit = int(min(48 * 2**20, max(32 * 2**20, 4 * block_bytes + 4 * 2**20)))

    grid_spec = pltpu.PrefetchScalarGridSpec(
        num_scalar_prefetch=0,
        grid=(n_par, n_k),
        in_specs=[
            pl.BlockSpec((B, block_rows, 128),
                         lambda p, k: (0, p * n_k + k, 0)),   # x_s_recon
            pl.BlockSpec((B, block_rows, 128),
                         lambda p, k: (0, p * n_k + k, 0)),   # x_s
        ],
        out_specs=pl.BlockSpec((1, B, 128), lambda p, k: (p, 0, 0)),
    )

    cost = pl.CostEstimate(
        flops=3 * B * n_rows_pad * 128,
        transcendentals=0,
        bytes_accessed=2 * B * n_rows_pad * 128 * itemsize + n_par * B * 128 * 4,
    )

    acc = pl.pallas_call(
        _ssq_kernel,
        grid_spec=grid_spec,
        out_shape=jax.ShapeDtypeStruct((n_par, B, 128), jnp.float32),
        compiler_params=pltpu.CompilerParams(
            dimension_semantics=("parallel", "arbitrary"),
            vmem_limit_bytes=vmem_limit),
        cost_estimate=cost,
    )(xr, xs)

    # Combine per-partition, per-lane partials (single tiny reduce).
    ssq = jnp.sum(acc, axis=(0, 2))                                   # (B,) f32

    ls = jnp.asarray(log_scale, jnp.float32).reshape(())
    # Gaussian log-likelihood with scale/constant folded in post-reduce:
    #   sum_{T,F} log N(x_s; x_s_recon, exp(ls))
    #     = -0.5 * exp(-2*ls) * ssq - TF * (ls + 0.5*log(2*pi))
    recon = -0.5 * jnp.exp(-2.0 * ls) * ssq - TF * (ls + _HALF_LOG_2PI)  # (B,)

    # KL over the tiny (B, L) latents in plain JAX (negligible work; keeping it
    # out of the streaming kernel removes three double-buffered inputs and a
    # cold branch from the hot loop).
    z = timbre_latent.astype(jnp.float32)
    mu = tau_mu.astype(jnp.float32)
    std = tau_std.astype(jnp.float32)
    log_q = -0.5 * jnp.square((z - mu) / std) - jnp.log(std) - _HALF_LOG_2PI
    log_p = -0.5 * jnp.square(z) - _HALF_LOG_2PI
    kl = jnp.sum(log_q - log_p, axis=-1)                              # (B,)

    loss = jnp.mean(kl - recon)   # elbo
    return {"loss": loss, "recon_x": jnp.mean(recon), "kld": jnp.mean(kl)}


def _reference(x_s, x_s_recon, z, mu, std, log_scale):
    # Pure-JAX replica of the PyTorch forward, for verification.
    scale = jnp.exp(log_scale)
    log_pxz = (-(x_s - x_s_recon) ** 2 / (2.0 * scale ** 2)
               - jnp.log(scale) - _HALF_LOG_2PI)
    recon = jnp.sum(log_pxz, axis=(1, 2))
    log_q = (-(z - mu) ** 2 / (2.0 * std ** 2) - jnp.log(std) - _HALF_LOG_2PI)
    log_p = (-(z ** 2) / 2.0 - _HALF_LOG_2PI)
    kl = jnp.sum(log_q - log_p, axis=-1)
    return {"loss": jnp.mean(kl - recon),
            "recon_x": jnp.mean(recon),
            "kld": jnp.mean(kl)}


if __name__ == "__main__":
    key = jax.random.PRNGKey(0)
    # T*F = 5670 is deliberately NOT a multiple of 128 so the zero-padding
    # path is exercised; block_rows=8 forces a (2 parallel x 3 reduction)
    # grid at this small test shape. Production sizes use the default
    # byte-budgeted (~4 MiB) blocks.
    B, T, F, L = 2, 63, 90, 32

    keys = jax.random.split(key, 7)
    x_m = jax.random.normal(keys[0], (B, T, F), jnp.float32)
    x_m_recon = jax.random.normal(keys[1], (B, T, F), jnp.float32)
    x_s = jax.random.normal(keys[2], (B, T, F), jnp.float32)
    x_s_recon = jax.random.normal(keys[3], (B, T, F), jnp.float32)
    timbre_latent = jax.random.normal(keys[4], (B, L), jnp.float32)
    tau_mu = jax.random.normal(keys[5], (B, L), jnp.float32)
    tau_std = jax.nn.softplus(jax.random.normal(keys[6], (B, L), jnp.float32)) + 1e-3

    # deterministic parameter init: nn.Parameter(torch.Tensor([0.0]))
    log_scale = jnp.zeros((1,), jnp.float32)

    out = elbo_loss_vae(x_m, x_m_recon, x_s, x_s_recon,
                        timbre_latent, tau_mu, tau_std, log_scale,
                        block_rows=8)
    out = jax.tree_util.tree_map(jax.block_until_ready, out)

    ref = _reference(x_s, x_s_recon, timbre_latent, tau_mu, tau_std,
                     log_scale[0])

    ok = True
    for name in ("loss", "recon_x", "kld"):
        if not jnp.allclose(out[name], ref[name], rtol=1e-5, atol=1e-5):
            ok = False
            print(f"MISMATCH {name}: kernel={out[name]} ref={ref[name]}")

    if ok:
        print("KERNEL_OK")
</pallas_src>

<mosaic_0001>
module attributes {stable_mosaic.version = 11 : i64} {
  func.func @_ssq_kernel(%arg0: i32, %arg1: i32, %arg2: memref<2x8x128xf32, #tpu.memory_space<vmem>>, %arg3: memref<2x8x128xf32, #tpu.memory_space<vmem>>, %arg4: memref<1x2x128xf32, #tpu.memory_space<vmem>>) attributes {dimension_semantics = [#tpu.dimension_semantics<parallel>, #tpu.dimension_semantics<arbitrary>], iteration_bounds = array<i64: 2, 3>, scalar_prefetch = 0 : i64, scratch_operands = 0 : i64, tpu.core_type = #tpu.core_type<tc>, window_params = [{transform_indices = @transform_0, window_bounds = array<i64: 2, 8, 128>}, {transform_indices = @transform_1, window_bounds = array<i64: 2, 8, 128>}, {transform_indices = @transform_2, window_bounds = array<i64: 1, 2, 128>}]} {
    %c0_i32 = arith.constant 0 : i32
    %0 = arith.cmpi eq, %arg1, %c0_i32 : i32
    %1 = arith.extui %0 : i1 to i32
    %c0_i32_0 = arith.constant 0 : i32
    %2 = arith.cmpi ne, %1, %c0_i32_0 : i32
    scf.if %2 {
      %cst_12 = arith.constant 0.000000e+00 : f32
      %12 = vector.broadcast %cst_12 : f32 to vector<1x2x128xf32>
      %c0_13 = arith.constant 0 : index
      %c0_14 = arith.constant 0 : index
      %c0_15 = arith.constant 0 : index
      %13 = vector.load %arg4[%c0_13, %c0_14, %c0_15] : memref<1x2x128xf32, #tpu.memory_space<vmem>>, vector<1x2x128xf32>
      tpu.vector_store %arg4[%c0_13, %c0_14, %c0_15], %12 {strides = array<i32>} : memref<1x2x128xf32, #tpu.memory_space<vmem>>, vector<1x2x128xf32>,
    } else {
    }
    %c0 = arith.constant 0 : index
    %c0_1 = arith.constant 0 : index
    %c0_2 = arith.constant 0 : index
    %3 = vector.load %arg3[%c0, %c0_1, %c0_2] : memref<2x8x128xf32, #tpu.memory_space<vmem>>, vector<2x8x128xf32>
    %c0_3 = arith.constant 0 : index
    %c0_4 = arith.constant 0 : index
    %c0_5 = arith.constant 0 : index
    %4 = vector.load %arg2[%c0_3, %c0_4, %c0_5] : memref<2x8x128xf32, #tpu.memory_space<vmem>>, vector<2x8x128xf32>
    %5 = arith.subf %3, %4 : vector<2x8x128xf32>
    %c0_6 = arith.constant 0 : index
    %c0_7 = arith.constant 0 : index
    %c0_8 = arith.constant 0 : index
    %6 = vector.load %arg4[%c0_6, %c0_7, %c0_8] : memref<1x2x128xf32, #tpu.memory_space<vmem>>, vector<1x2x128xf32>
    %7 = arith.mulf %5, %5 : vector<2x8x128xf32>
    %cst = arith.constant dense<0.000000e+00> : vector<2x128xf32>
    %8 = vector.multi_reduction <add>, %7, %cst [1] : vector<2x8x128xf32> to vector<2x128xf32>
    %9 = vector.shape_cast %8 : vector<2x128xf32> to vector<1x2x128xf32>
    %10 = arith.addf %6, %9 : vector<1x2x128xf32>
    %c0_9 = arith.constant 0 : index
    %c0_10 = arith.constant 0 : index
    %c0_11 = arith.constant 0 : index
    %11 = vector.load %arg4[%c0_9, %c0_10, %c0_11] : memref<1x2x128xf32, #tpu.memory_space<vmem>>, vector<1x2x128xf32>
    tpu.vector_store %arg4[%c0_9, %c0_10, %c0_11], %10 {strides = array<i32>} : memref<1x2x128xf32, #tpu.memory_space<vmem>>, vector<1x2x128xf32>,
    return
  }
  func.func @transform_0(%arg0: i32, %arg1: i32) -> (i32, i32, i32) {
    %c3_i32 = arith.constant 3 : i32
    %0 = arith.muli %arg0, %c3_i32 : i32
    %1 = arith.addi %0, %arg1 : i32
    %c0_i32 = arith.constant 0 : i32
    %c0_i32_0 = arith.constant 0 : i32
    %c0_i32_1 = arith.constant 0 : i32
    return %c0_i32, %1, %c0_i32_0 : i32, i32, i32
  }
  func.func @transform_1(%arg0: i32, %arg1: i32) -> (i32, i32, i32) {
    %c3_i32 = arith.constant 3 : i32
    %0 = arith.muli %arg0, %c3_i32 : i32
    %1 = arith.addi %0, %arg1 : i32
    %c0_i32 = arith.constant 0 : i32
    %c0_i32_0 = arith.constant 0 : i32
    %c0_i32_1 = arith.constant 0 : i32
    return %c0_i32, %1, %c0_i32_0 : i32, i32, i32
  }
  func.func @transform_2(%arg0: i32, %arg1: i32) -> (i32, i32, i32) {
    %c0_i32 = arith.constant 0 : i32
    %c0_i32_0 = arith.constant 0 : i32
    %c0_i32_1 = arith.constant 0 : i32
    return %arg0, %c0_i32, %c0_i32_0 : i32, i32, i32
  }
}

</mosaic_0001>

<llo_original>
// kernel: tpu_custom_call.1
$region0: #{tpu_custom_call.1}
  #allocation0 [shape = 'u32[]', space=smem, size = 0x4, offset = 0x4, fixed_abs, tag = 'smem constant byte address 0x4 - core index']
  #allocation1 [shape = 'u32[72,128]{1,0:T(1,128)}', space=vmem, size = 0x9000, scoped, tag = 'internal scratch']
  %s0 = inlined_call_operand.hbm [shape: f32[2,48,128], index: 0, kind: input, shape index: {}]
  %s1 = inlined_call_operand.hbm [shape: f32[2,48,128], index: 1, kind: input, shape index: {}]
  %s2 = inlined_call_operand.hbm [shape: f32[2,2,128], index: 2, kind: output, shape index: {}]
  %s3 = sld [smem:[#allocation0]]
  $region53: #{tpu_custom_call.1} parent=0
    _
  %s5 = ssub.s32 1, %s3
  %s6 = scalar_select 0, %s5, %s3
  $region1: #{tpu_custom_call.1} parent=0
    #allocation2 [shape = 'u8[16384]{0}', space=vmem, size = 0x4000, scoped, tag = 'input window, operand 0']
    #allocation3 [shape = 's32[2]{0}', space=sflag, size = 0x8, scoped, tag = 'scoped memory for tpu_custom_call.1']
    #allocation4 [shape = 's32[2]{0}', space=sflag, size = 0x8, scoped, tag = 'scoped memory for tpu_custom_call.1']
    #allocation5 [shape = 'u8[16384]{0}', space=vmem, size = 0x4000, scoped, tag = 'input window, operand 1']
    #allocation6 [shape = 's32[2]{0}', space=sflag, size = 0x8, scoped, tag = 'scoped memory for tpu_custom_call.1']
    #allocation7 [shape = 'u8[2048]{0}', space=vmem, size = 0x800, scoped, tag = 'output window, operand 0']
    %7 = vsyncpa [#allocation3], 0
    %s8 = scalar_lea.sflag [#allocation3], 1
    %9 = vsyncpa %s8, 0
    %10 = vsyncpa [#allocation6], 0
    %s11 = scalar_lea.sflag [#allocation6], 1
    %12 = vsyncpa %s11, 0
    %13 = vsyncpa [#allocation4], 0
    %s14 = scalar_lea.sflag [#allocation4], 1
    %15 = vsyncpa %s14, 0
    loop: start=0, step=1, limit=8
    $region2: #{tpu_custom_call.1} parent=1 // loop_pre_header
      _
    $region3: #{tpu_custom_call.1} parent=1 // loop_header
      %s17 = sphi 0, %s21
      %p18 = scmp.ge.s32.totalorder %s17, 8
      %s24 = sphi 0, %s36
      %s25 = sphi 0, %s32
      %s26 = sphi 0, %s24
      %s27 = sphi 0, %s25
      %s28 = sphi 0, %s26
      %s29 = sphi 0, %s27
      %s43 = sphi 0, %s45
      %s46 = sphi 0, %s43
      %s47 = sphi 0, %s46
      %s63 = sphi 0, %s47
      %s73 = sphi 0, %s75
      %s76 = sphi 0, %s73
      %s77 = sphi 0, %s76
      %s93 = sphi 0, %s77
      %s99 = sphi 0, %s101
      %s102 = sphi 0, %s99
      %s103 = sphi 0, %s102
      %s119 = sphi 0, %s103
    $region4: #{tpu_custom_call.1} parent=1 // loop_header_branch
      %20 = sbr.rel (%p18) target = $region8
    $region5: #{tpu_custom_call.1} parent=1 // loop_body
      %s22 = ssub.s32 %s17, 1
      %s23 = ssub.s32 %s17, 2
      %s30 = sadd.s32 1, %s25
      %p31 = scmp.ge.s32.totalorder %s30, 3
      %s32 = scalar_select %p31, 0, %s30
      %s33 = sadd.s32 1, %s24
      %s34 = scalar_select %p31, %s33, %s24
      %p35 = scmp.ge.s32.totalorder %s34, 2
      %s36 = scalar_select %p35, 0, %s34
      %s37 = smul.u32 %s24, 3
      %s38 = sadd.s32 %s37, %s25
      %s39 = smul.u32 %s36, 3
      %s40 = sadd.s32 %s39, %s32
      %s41 = ssub.s32 %s38, %s40
      %p42 = scmp.eq.s32.totalorder %s41, 0
      %s44 = sadd.s32 %s43, 1
      %s45 = scalar_select %p42, %s43, %s44
      %p48 = pneg %p42
      %p49 = scmp.eq.s32.totalorder %s17, 5
      %p50 = por %p48, %p49
      %p51 = scmp.ne.s32.totalorder %s43, %s46
      %p52 = scmp.eq.s32.totalorder %s17, 0
      %p53 = por %p51, %p52
      %p54 = scmp.ne.s32.totalorder %s43, %s46
      %p55 = scmp.eq.s32.totalorder %s22, 5
      %p56 = por %p54, %p55
      %p57 = scmp.ne.s32.totalorder %s46, %s47
      %p58 = scmp.eq.s32.totalorder %s22, 0
      %p59 = por %p57, %p58
      %p60 = scmp.ne.s32.totalorder %s46, %s47
      %p61 = scmp.eq.s32.totalorder %s23, 5
      %p62 = por %p60, %p61
      %p64 = scmp.ne.s32.totalorder %s47, %s63
      %p65 = scmp.eq.s32.totalorder %s23, 0
      %p66 = por %p64, %p65
      %s67 = smul.u32 %s24, 3
      %s68 = sadd.s32 %s67, %s25
      %s69 = smul.u32 %s36, 3
      %s70 = sadd.s32 %s69, %s32
      %s71 = ssub.s32 %s68, %s70
      %p72 = scmp.eq.s32.totalorder %s71, 0
      %s74 = sadd.s32 %s73, 1
      %s75 = scalar_select %p72, %s73, %s74
      %p78 = pneg %p72
      %p79 = scmp.eq.s32.totalorder %s17, 5
      %p80 = por %p78, %p79
      %p81 = scmp.ne.s32.totalorder %s73, %s76
      %p82 = scmp.eq.s32.totalorder %s17, 0
      %p83 = por %p81, %p82
      %p84 = scmp.ne.s32.totalorder %s73, %s76
      %p85 = scmp.eq.s32.totalorder %s22, 5
      %p86 = por %p84, %p85
      %p87 = scmp.ne.s32.totalorder %s76, %s77
      %p88 = scmp.eq.s32.totalorder %s22, 0
      %p89 = por %p87, %p88
      %p90 = scmp.ne.s32.totalorder %s76, %s77
      %p91 = scmp.eq.s32.totalorder %s23, 5
      %p92 = por %p90, %p91
      %p94 = scmp.ne.s32.totalorder %s77, %s93
      %p95 = scmp.eq.s32.totalorder %s23, 0
      %p96 = por %p94, %p95
      %s97 = ssub.s32 %s24, %s36
      %p98 = scmp.eq.s32.totalorder %s97, 0
      %s100 = sadd.s32 %s99, 1
      %s101 = scalar_select %p98, %s99, %s100
      %p104 = pneg %p98
      %p105 = scmp.eq.s32.totalorder %s17, 5
      %p106 = por %p104, %p105
      %p107 = scmp.ne.s32.totalorder %s99, %s102
      %p108 = scmp.eq.s32.totalorder %s17, 0
      %p109 = por %p107, %p108
      %p110 = scmp.ne.s32.totalorder %s99, %s102
      %p111 = scmp.eq.s32.totalorder %s22, 5
      %p112 = por %p110, %p111
      %p113 = scmp.ne.s32.totalorder %s102, %s103
      %p114 = scmp.eq.s32.totalorder %s22, 0
      %p115 = por %p113, %p114
      %p116 = scmp.ne.s32.totalorder %s102, %s103
      %p117 = scmp.eq.s32.totalorder %s23, 5
      %p118 = por %p116, %p117
      %p120 = scmp.ne.s32.totalorder %s103, %s119
      %p121 = scmp.eq.s32.totalorder %s23, 0
      %p122 = por %p120, %p121
      %p123 = scmp.le.s32.totalorder 1, %s17
      %p124 = scmp.lt.s32.totalorder %s17, 7
      %p125 = pnand %p123, %p124
      %p126 = pneg %p125
      // Predicated region
      $region9: #{tpu_custom_call.1} parent=5 // pred_check
        _
      $region10: #{tpu_custom_call.1} parent=5 // pred_check_branch
        %128 = sbr.rel (%p125) target = $region12
      $region11: #{tpu_custom_call.1} parent=5 // pred_region
        %s129 = ssub.s32 %s17, 1
      $region12: #{tpu_custom_call.1} parent=5 // pred_fallthru
        _
      %p130 = scmp.lt.s32.totalorder %s17, 6
      // Predicated region
      $region13: #{tpu_custom_call.1} parent=5 // pred_check
        %p131 = pneg %p130
      $region14: #{tpu_custom_call.1} parent=5 // pred_check_branch
        %133 = sbr.rel (%p131) target = $region16
      $region15: #{tpu_custom_call.1} parent=5 // pred_region
        // Predicated region
        $region17: #{tpu_custom_call.1} parent=15 // pred_check
          %p134 = pneg %p53
        $region18: #{tpu_custom_call.1} parent=15 // pred_check_branch
          %136 = sbr.rel (%p134) target = $region20
        $region19: #{tpu_custom_call.1} parent=15 // pred_region
          %s137 = sand.u32 %s43, 1
          %s138 = scalar_lea.sflag [#allocation3], %s137
          %s139 = sand.u32 %s43, 1
          %s140 = smul.addr %s139, 16
          %s141 = scalar_lea.vmem [#allocation2], %s140
          %s142 = smul.u32 %s24, 3
          %s143 = sadd.s32 %s142, %s25
          %145 = vsyncadd %s138, 0
          %s146 = smul.addr %s143, 8
          %s147 = scalar_lea.hbm %s0, %s146
          %s148 = sshll.u32 %s147, 4
          %s149 = int_to_ptr.hbm [resolvable:$true] %s148
          %s150 = sshll.u32 %s141, 4
          %s151 = int_to_ptr.vmem [resolvable:$true] %s150
          %156 = dma.hbm_to_vmem [thread:$0]  %s149, 256, %s151, %s138, 768, 128, 8
        $region20: #{tpu_custom_call.1} parent=15 // pred_fallthru
          _
        // Predicated region
        $region21: #{tpu_custom_call.1} parent=15 // pred_check
          %p157 = pneg %p83
        $region22: #{tpu_custom_call.1} parent=15 // pred_check_branch
          %159 = sbr.rel (%p157) target = $region24
        $region23: #{tpu_custom_call.1} parent=15 // pred_region
          %s160 = sand.u32 %s73, 1
          %s161 = scalar_lea.sflag [#allocation6], %s160
          %s162 = sand.u32 %s73, 1
          %s163 = smul.addr %s162, 16
          %s164 = scalar_lea.vmem [#allocation5], %s163
          %s165 = smul.u32 %s24, 3
          %s166 = sadd.s32 %s165, %s25
          %168 = vsyncadd %s161, 0
          %s169 = smul.addr %s166, 8
          %s170 = scalar_lea.hbm %s1, %s169
          %s171 = sshll.u32 %s170, 4
          %s172 = int_to_ptr.hbm [resolvable:$true] %s171
          %s173 = sshll.u32 %s164, 4
          %s174 = int_to_ptr.vmem [resolvable:$true] %s173
          %179 = dma.hbm_to_vmem [thread:$0]  %s172, 256, %s174, %s161, 768, 128, 8
        $region24: #{tpu_custom_call.1} parent=15 // pred_fallthru
          _
      $region16: #{tpu_custom_call.1} parent=5 // pred_fallthru
        _
      %p180 = scmp.le.s32.totalorder 1, %s17
      %p181 = scmp.lt.s32.totalorder %s17, 7
      %p182 = pnand %p180, %p181
      %p183 = pneg %p182
      // Predicated region
      $region25: #{tpu_custom_call.1} parent=5 // pred_check
        _
      $region26: #{tpu_custom_call.1} parent=5 // pred_check_branch
        %185 = sbr.rel (%p182) target = $region28
      $region27: #{tpu_custom_call.1} parent=5 // pred_region
        %s186 = ssub.s32 %s17, 1
        %s187 = sand.u32 %s46, 1
        %s188 = scalar_lea.sflag [#allocation3], %s187
        %s189 = sand.u32 %s46, 1
        %s190 = smul.addr %s189, 16
        %s191 = scalar_lea.vmem [#allocation2], %s190
        // Predicated region
        $region29: #{tpu_custom_call.1} parent=27 // pred_check
          %p192 = pneg %p59
        $region30: #{tpu_custom_call.1} parent=27 // pred_check_branch
          %194 = sbr.rel (%p192) target = $region32
        $region31: #{tpu_custom_call.1} parent=27 // pred_region
          %196 = dma.done %s188, 256
        $region32: #{tpu_custom_call.1} parent=27 // pred_fallthru
          _
        %s197 = sand.u32 %s76, 1
        %s198 = scalar_lea.sflag [#allocation6], %s197
        %s199 = sand.u32 %s76, 1
        %s200 = smul.addr %s199, 16
        %s201 = scalar_lea.vmem [#allocation5], %s200
        // Predicated region
        $region33: #{tpu_custom_call.1} parent=27 // pred_check
          %p202 = pneg %p89
        $region34: #{tpu_custom_call.1} parent=27 // pred_check_branch
          %204 = sbr.rel (%p202) target = $region36
        $region35: #{tpu_custom_call.1} parent=27 // pred_region
          %206 = dma.done %s198, 256
        $region36: #{tpu_custom_call.1} parent=27 // pred_fallthru
          _
        %s207 = sand.u32 %s46, 1
        %s208 = scalar_lea.sflag [#allocation3], %s207
        %s209 = sand.u32 %s46, 1
        %s210 = smul.addr %s209, 16
        %s211 = scalar_lea.vmem [#allocation2], %s210
        %p212 = pneg %p59
        %p213 = pneg %p56
        %s214 = sand.u32 %s76, 1
        %s215 = scalar_lea.sflag [#allocation6], %s214
        %s216 = sand.u32 %s76, 1
        %s217 = smul.addr %s216, 16
        %s218 = scalar_lea.vmem [#allocation5], %s217
        %p219 = pneg %p89
        %p220 = pneg %p86
        %p221 = pneg %p115
        %p222 = pneg %p112
        %s223 = sand.u32 %s102, 1
        %s224 = scalar_lea.sflag [#allocation4], %s223
        %s225 = sand.u32 %s102, 1
        %s226 = smul.addr %s225, 2
        %s227 = scalar_lea.vmem [#allocation7], %s226
        %s228 = smul.u32 %s26, 3
        %s229 = sadd.s32 %s228, %s27
        %s230 = smul.u32 %s26, 3
        %s231 = sadd.s32 %s230, %s27
        %p232 = scmp.eq.s32.totalorder %s27, 0
        // Predicated region
        $region37: #{tpu_custom_call.1} parent=27 // pred_check
          %p233 = pneg %p232
        $region38: #{tpu_custom_call.1} parent=27 // pred_check_branch
          %235 = sbr.rel (%p233) target = $region40
        $region39: #{tpu_custom_call.1} parent=27 // pred_region
          %236 = vst [vmem:[%s227] sm:$0x3] 0.0
        $region40: #{tpu_custom_call.1} parent=27 // pred_fallthru
          _
        %v237 = vld [vmem:[%s201] sm:$0xff]
        %v238 = vld [vmem:[%s201 + $0x8] sm:$0xff]
        %v239 = vld [vmem:[%s191] sm:$0xff]
        %v240 = vld [vmem:[%s191 + $0x8] sm:$0xff]
        %v241 = vsub.f32 %v237, %v239
        %v242 = vsub.f32 %v238, %v240
        %v243 = vld [vmem:[%s227] sm:$0x3]
        %v244 = vmul.f32 %v241, %v241
        %v245 = vmul.f32 %v242, %v242
        %v246 = vrot.slane %v244, 4
        %v247 = vadd.f32 %v244, %v246
        %v248 = vrot.slane %v247, 2
        %v249 = vadd.f32 %v247, %v248
        %v250 = vrot.slane %v249, 1
        %v251 = vadd.f32 %v249, %v250
        %v252 = vrot.slane %v245, 4
        %v253 = vadd.f32 %v245, %v252
        %v254 = vrot.slane %v253, 2
        %v255 = vadd.f32 %v253, %v254
        %v256 = vrot.slane %v255, 1
        %v257 = vadd.f32 %v255, %v256
        %vm260 = vcmask 1041409
        %v261 = vsel %vm260, %v257, %v251
        %v263 = vadd.f32 %v243, %v261
        %264 = vst [vmem:[%s227] sm:$0x3] %v263
        %s265 = sand.u32 %s102, 1
        %s266 = scalar_lea.sflag [#allocation4], %s265
        %s267 = sand.u32 %s102, 1
        %s268 = smul.addr %s267, 2
        %s269 = scalar_lea.vmem [#allocation7], %s268
        // Predicated region
        $region41: #{tpu_custom_call.1} parent=27 // pred_check
          %p270 = pneg %p112
        $region42: #{tpu_custom_call.1} parent=27 // pred_check_branch
          %272 = sbr.rel (%p270) target = $region44
        $region43: #{tpu_custom_call.1} parent=27 // pred_region
          %274 = vsyncadd %s266, 0
          %s275 = smul.addr %s26, 2
          %s276 = scalar_lea.hbm %s2, %s275
          %s278 = sshll.u32 %s269, 4
          %s279 = int_to_ptr.vmem [resolvable:$true] %s278
          %s280 = sshll.u32 %s276, 4
          %s281 = int_to_ptr.hbm [resolvable:$true] %s280
          %283 = dma.vmem_to_hbm [thread:$0]  %s279, 32, %s281, %s266
        $region44: #{tpu_custom_call.1} parent=27 // pred_fallthru
          _
      $region28: #{tpu_custom_call.1} parent=5 // pred_fallthru
        _
      %p284 = scmp.le.s32.totalorder 2, %s17
      // Predicated region
      $region45: #{tpu_custom_call.1} parent=5 // pred_check
        %p285 = pneg %p284
      $region46: #{tpu_custom_call.1} parent=5 // pred_check_branch
        %287 = sbr.rel (%p285) target = $region48
      $region47: #{tpu_custom_call.1} parent=5 // pred_region
        %s288 = ssub.s32 %s17, 2
        // Predicated region
        $region49: #{tpu_custom_call.1} parent=47 // pred_check
          %p289 = pneg %p118
        $region50: #{tpu_custom_call.1} parent=47 // pred_check_branch
          %291 = sbr.rel (%p289) target = $region52
        $region51: #{tpu_custom_call.1} parent=47 // pred_region
          %s292 = sand.u32 %s103, 1
          %s293 = scalar_lea.sflag [#allocation4], %s292
          %s294 = sand.u32 %s103, 1
          %s295 = smul.addr %s294, 2
          %s296 = scalar_lea.vmem [#allocation7], %s295
          %298 = dma.done %s293, 32
        $region52: #{tpu_custom_call.1} parent=47 // pred_fallthru
          _
      $region48: #{tpu_custom_call.1} parent=5 // pred_fallthru
        _
    $region6: #{tpu_custom_call.1} parent=1 // loop_footer
      %s21 = sadd.s32 1, %s17
    $region7: #{tpu_custom_call.1} parent=1 // loop_footer_branch
      %16 = sbr.rel target = $region3
    $region8: #{tpu_custom_call.1} parent=1 // loop_exit
      _
    %299 = vsyncpa [#allocation3], 1
    %s300 = scalar_lea.sflag [#allocation3], 1
    %301 = vsyncpa %s300, 1
    %302 = vsyncpa [#allocation6], 1
    %s303 = scalar_lea.sflag [#allocation6], 1
    %304 = vsyncpa %s303, 1
    %305 = vsyncpa [#allocation4], 1
    %s306 = scalar_lea.sflag [#allocation4], 1
    %307 = vsyncpa %s306, 1

</llo_original>
